<compile_context>
chip_gen: v6e
topology: v6e:2x2x1
jax: 0.10.0
libtpu: 0.0.40
codegen_flags: <defaults>
</compile_context>

<pallas_src>
import jax
import jax.numpy as jnp
from jax.experimental import pallas as pl
from jax.experimental.pallas import tpu as pltpu

F_IN = 13      # concat([a, x]) feature count
F_PAD = 16     # padded feature count (bf16 packs 16 sublanes per vreg)
HIDDEN = 64


def _round_up(n, m):
    return ((n + m - 1) // m) * m


def _discriminator_kernel(feat_ref, w1_ref, b1_ref, w2_ref, b2_ref, out_ref):
    # feat: (F_PAD, TB) bf16   (sublanes = features, lanes = batch)
    # w1:   (HIDDEN, F_PAD) bf16, zero-padded columns for the 3 pad features
    # b1:   (HIDDEN, 1) f32
    # w2:   (1, HIDDEN) bf16
    # b2:   (1, 1) f32
    # out:  (1, TB) f32        (lane-dense strip of the batch)

    # Layer 1 (concat already fused into the packed feature slab):
    #   hT[j, b] = sum_k W1[j, k] * feat[k, b]
    h = jnp.dot(w1_ref[...], feat_ref[...],
                preferred_element_type=jnp.float32)       # (HIDDEN, TB) f32
    h = h + b1_ref[...]                                   # lane broadcast of bias
    h = jnp.where(h > 0, h, 0.2 * h)                      # LeakyReLU(0.2)

    # Layer 2: (1, 64) x (64, TB) -> (1, TB), bf16 operands, f32 accumulation.
    out = jnp.dot(w2_ref[...], h.astype(jnp.bfloat16),
                  preferred_element_type=jnp.float32)
    out_ref[...] = out + b2_ref[...]


def discriminator_forward(x, a, params, *, block_b=8192):
    """x: (B, 12), a: (B, 1) -> validity (B, 1). Matches PyTorch Discriminator."""
    w1, b1, w2, b2 = params          # (64, 13), (64,), (1, 64), (1,)
    B = x.shape[0]

    # ---- batch tiling (lanes must be 128-aligned unless a single full block)
    tb_target = _round_up(block_b, 128)
    B128 = _round_up(B, 128)
    if B128 <= 128:
        tb = 128                                  # one tiny block
    elif B128 <= 2 * tb_target:
        # split into two tiles so the "parallel" axis can span both v7x TCs
        tb = _round_up(pl.cdiv(B128, 2), 128)
    else:
        tb = tb_target
    B_pad = _round_up(B, tb)
    nb = B_pad // tb

    # ---- single fused pre-pass: cast + concat + transpose + pad ------------
    # Feature-major bf16 slab (F_PAD, B_pad): dense lanes, `a` folded in as
    # feature row 0 (same ordering as torch.cat((a, x), -1)).
    feat = jnp.concatenate(
        [a.astype(jnp.bfloat16).T,                        # (1,  B)  -> row 0
         x.astype(jnp.bfloat16).T,                        # (12, B)  -> rows 1..12
         jnp.zeros((F_PAD - F_IN, B), jnp.bfloat16)],     # zero pad features
        axis=0)                                           # (F_PAD, B)
    if B_pad != B:
        feat = jnp.pad(feat, ((0, 0), (0, B_pad - B)))

    # ---- small VMEM-resident weights ---------------------------------------
    w1_pad = (jnp.zeros((HIDDEN, F_PAD), jnp.float32)
              .at[:, :F_IN].set(jnp.asarray(w1, jnp.float32))
              .astype(jnp.bfloat16))                          # (64, 16)
    b1_2d = jnp.asarray(b1, jnp.float32)[:, None]             # (64, 1)
    w2_2d = jnp.asarray(w2, jnp.float32).astype(jnp.bfloat16) # (1, 64)
    b2_2d = jnp.asarray(b2, jnp.float32)[None, :]             # (1, 1)

    out = pl.pallas_call(
        _discriminator_kernel,
        out_shape=jax.ShapeDtypeStruct((1, B_pad), jnp.float32),
        grid=(nb,),
        in_specs=[
            pl.BlockSpec((F_PAD, tb), lambda i: (0, i)),      # feat tile (pipelined)
            pl.BlockSpec((HIDDEN, F_PAD), lambda i: (0, 0)),  # W1  (VMEM-resident)
            pl.BlockSpec((HIDDEN, 1), lambda i: (0, 0)),      # b1
            pl.BlockSpec((1, HIDDEN), lambda i: (0, 0)),      # w2
            pl.BlockSpec((1, 1), lambda i: (0, 0)),           # b2
        ],
        out_specs=pl.BlockSpec((1, tb), lambda i: (0, i)),    # lane-dense strip
        compiler_params=pltpu.CompilerParams(
            dimension_semantics=("parallel",)),
    )(feat, w1_pad, b1_2d, w2_2d, b2_2d)

    return out.reshape(-1)[:B][:, None]                       # (B, 1)


def init_params(key):
    """Deterministic init matching nn.Linear shapes: (64,13),(64,),(1,64),(1,)."""
    k1, k2, k3, k4 = jax.random.split(key, 4)
    lim1 = 1.0 / (13.0 ** 0.5)
    lim2 = 1.0 / (64.0 ** 0.5)
    w1 = jax.random.uniform(k1, (64, 13), jnp.float32, -lim1, lim1)
    b1 = jax.random.uniform(k2, (64,), jnp.float32, -lim1, lim1)
    w2 = jax.random.uniform(k3, (1, 64), jnp.float32, -lim2, lim2)
    b2 = jax.random.uniform(k4, (1,), jnp.float32, -lim2, lim2)
    return (w1, b1, w2, b2)


def _reference(x, a, params):
    """Pure-JAX reference using the same bf16 transport rounding as the kernel."""
    w1, b1, w2, b2 = params
    xr = x.astype(jnp.bfloat16).astype(jnp.float32)
    ar = a.astype(jnp.bfloat16).astype(jnp.float32)
    w1r = w1.astype(jnp.bfloat16).astype(jnp.float32)
    w2r = w2.astype(jnp.bfloat16).astype(jnp.float32)
    dis_in = jnp.concatenate((ar, xr), axis=-1)
    h = dis_in @ w1r.T + b1
    h = jnp.where(h > 0, h, 0.2 * h)
    return h @ w2r.T + b2


if __name__ == "__main__":
    key = jax.random.PRNGKey(0)
    kx, ka, kp = jax.random.split(key, 3)
    params = init_params(kp)

    # Test 1: tiny batch (single 128-lane block).
    B = 8
    x = jax.random.normal(kx, (B, 12), jnp.float32)
    a = jax.random.normal(ka, (B, 1), jnp.float32)
    validity = discriminator_forward(x, a, params)
    jax.block_until_ready(validity)
    ref = _reference(x, a, params)
    assert validity.shape == (B, 1)
    assert jnp.allclose(validity, ref, atol=1e-2, rtol=1e-2)

    # Test 2: larger ragged batch -> two-tile parallel grid + padding path.
    B2 = 300
    kx2, ka2 = jax.random.split(kx)
    x2 = jax.random.normal(kx2, (B2, 12), jnp.float32)
    a2 = jax.random.normal(ka2, (B2, 1), jnp.float32)
    validity2 = discriminator_forward(x2, a2, params)
    jax.block_until_ready(validity2)
    ref2 = _reference(x2, a2, params)
    assert validity2.shape == (B2, 1)
    assert jnp.allclose(validity2, ref2, atol=1e-2, rtol=1e-2)

    print("KERNEL_OK")
</pallas_src>

<mosaic_0001>
module attributes {stable_mosaic.version = 11 : i64} {
  func.func @_discriminator_kernel(%arg0: i32, %arg1: memref<16x128xbf16, #tpu.memory_space<vmem>>, %arg2: memref<64x16xbf16, #tpu.memory_space<vmem>>, %arg3: memref<64x1xf32, #tpu.memory_space<vmem>>, %arg4: memref<1x64xbf16, #tpu.memory_space<vmem>>, %arg5: memref<1x1xf32, #tpu.memory_space<vmem>>, %arg6: memref<1x128xf32, #tpu.memory_space<vmem>>) attributes {dimension_semantics = [#tpu.dimension_semantics<parallel>], iteration_bounds = array<i64: 1>, scalar_prefetch = 0 : i64, scratch_operands = 0 : i64, tpu.core_type = #tpu.core_type<tc>, window_params = [{transform_indices = @transform_0, window_bounds = array<i64: 16, 128>}, {pipeline_mode = #tpu.pipeline_mode<synchronous>, transform_indices = @transform_1, window_bounds = array<i64: 64, 16>}, {pipeline_mode = #tpu.pipeline_mode<synchronous>, transform_indices = @transform_2, window_bounds = array<i64: 64, 1>}, {pipeline_mode = #tpu.pipeline_mode<synchronous>, transform_indices = @transform_3, window_bounds = array<i64: 1, 64>}, {pipeline_mode = #tpu.pipeline_mode<synchronous>, transform_indices = @transform_4, window_bounds = array<i64: 1, 1>}, {transform_indices = @transform_5, window_bounds = array<i64: 1, 128>}]} {
    %c0 = arith.constant 0 : index
    %c0_0 = arith.constant 0 : index
    %0 = vector.load %arg2[%c0, %c0_0] : memref<64x16xbf16, #tpu.memory_space<vmem>>, vector<64x16xbf16>
    %c0_1 = arith.constant 0 : index
    %c0_2 = arith.constant 0 : index
    %1 = vector.load %arg1[%c0_1, %c0_2] : memref<16x128xbf16, #tpu.memory_space<vmem>>, vector<16x128xbf16>
    %cst = arith.constant dense<0.000000e+00> : vector<64x128xf32>
    %2 = tpu.matmul %0, %1, %cst {dimension_numbers = #tpu.dot_dimension_numbers<[1], [0], [0], [1], [0, 0, 1, 1], [], []>} : vector<64x16xbf16>, vector<16x128xbf16>, vector<64x128xf32> -> vector<64x128xf32>
    %c0_3 = arith.constant 0 : index
    %c0_4 = arith.constant 0 : index
    %3 = vector.load %arg3[%c0_3, %c0_4] : memref<64x1xf32, #tpu.memory_space<vmem>>, vector<64x1xf32>
    %4 = vector.broadcast %3 : vector<64x1xf32> to vector<64x128xf32>
    %5 = arith.addf %2, %4 : vector<64x128xf32>
    %cst_5 = arith.constant 0.000000e+00 : f32
    %6 = vector.broadcast %cst_5 : f32 to vector<64x128xf32>
    %7 = arith.cmpf ogt, %5, %6 : vector<64x128xf32>
    %cst_6 = arith.constant 2.000000e-01 : f32
    %8 = vector.broadcast %cst_6 : f32 to vector<64x128xf32>
    %9 = arith.mulf %8, %5 : vector<64x128xf32>
    %10 = arith.select %7, %5, %9 : vector<64x128xi1>, vector<64x128xf32>
    %c0_7 = arith.constant 0 : index
    %c0_8 = arith.constant 0 : index
    %11 = vector.load %arg4[%c0_7, %c0_8] : memref<1x64xbf16, #tpu.memory_space<vmem>>, vector<1x64xbf16>
    %12 = arith.truncf %10 : vector<64x128xf32> to vector<64x128xbf16>
    %cst_9 = arith.constant dense<0.000000e+00> : vector<1x128xf32>
    %13 = tpu.matmul %11, %12, %cst_9 {dimension_numbers = #tpu.dot_dimension_numbers<[1], [0], [0], [1], [0, 0, 1, 1], [], []>} : vector<1x64xbf16>, vector<64x128xbf16>, vector<1x128xf32> -> vector<1x128xf32>
    %c0_10 = arith.constant 0 : index
    %c0_11 = arith.constant 0 : index
    %14 = vector.load %arg5[%c0_10, %c0_11] : memref<1x1xf32, #tpu.memory_space<vmem>>, vector<1x1xf32>
    %15 = vector.broadcast %14 : vector<1x1xf32> to vector<1x128xf32>
    %16 = arith.addf %13, %15 : vector<1x128xf32>
    %c0_12 = arith.constant 0 : index
    %c0_13 = arith.constant 0 : index
    %17 = vector.load %arg6[%c0_12, %c0_13] : memref<1x128xf32, #tpu.memory_space<vmem>>, vector<1x128xf32>
    tpu.vector_store %arg6[%c0_12, %c0_13], %16 {strides = array<i32>} : memref<1x128xf32, #tpu.memory_space<vmem>>, vector<1x128xf32>,
    return
  }
  func.func @transform_0(%arg0: i32) -> (i32, i32) {
    %c0_i32 = arith.constant 0 : i32
    %c0_i32_0 = arith.constant 0 : i32
    return %c0_i32, %arg0 : i32, i32
  }
  func.func @transform_1(%arg0: i32) -> (i32, i32) {
    %c0_i32 = arith.constant 0 : i32
    %c0_i32_0 = arith.constant 0 : i32
    %c0_i32_1 = arith.constant 0 : i32
    return %c0_i32, %c0_i32_0 : i32, i32
  }
  func.func @transform_2(%arg0: i32) -> (i32, i32) {
    %c0_i32 = arith.constant 0 : i32
    %c0_i32_0 = arith.constant 0 : i32
    %c0_i32_1 = arith.constant 0 : i32
    return %c0_i32, %c0_i32_0 : i32, i32
  }
  func.func @transform_3(%arg0: i32) -> (i32, i32) {
    %c0_i32 = arith.constant 0 : i32
    %c0_i32_0 = arith.constant 0 : i32
    %c0_i32_1 = arith.constant 0 : i32
    return %c0_i32, %c0_i32_0 : i32, i32
  }
  func.func @transform_4(%arg0: i32) -> (i32, i32) {
    %c0_i32 = arith.constant 0 : i32
    %c0_i32_0 = arith.constant 0 : i32
    %c0_i32_1 = arith.constant 0 : i32
    return %c0_i32, %c0_i32_0 : i32, i32
  }
  func.func @transform_5(%arg0: i32) -> (i32, i32) {
    %c0_i32 = arith.constant 0 : i32
    %c0_i32_0 = arith.constant 0 : i32
    return %c0_i32, %arg0 : i32, i32
  }
}

</mosaic_0001>

<llo_original>
// kernel: tpu_custom_call.1
$region0: #{tpu_custom_call.1}
  #allocation0 [shape = 'u32[]', space=smem, size = 0x4, offset = 0x4, fixed_abs, tag = 'smem constant byte address 0x4 - core index']
  #allocation1 [shape = 'u32[144,128]{1,0:T(1,128)}', space=vmem, size = 0x12000, scoped, tag = 'internal scratch']
  #allocation2 [shape = 'f32[1,1]{1,0:T(1,128)S(1)}', space=vmem, size = 0x200, scoped, tag = 'scoped memory for tpu_custom_call.1']
  %s0 = inlined_call_operand.vmem [shape: bf16[16,128], index: 0, kind: input, shape index: {}]
  %s1 = inlined_call_operand.vmem [shape: bf16[64,16], index: 1, kind: input, shape index: {}]
  %s2 = inlined_call_operand.vmem [shape: f32[64,1], index: 2, kind: input, shape index: {}]
  %s3 = inlined_call_operand.vmem [shape: bf16[1,64], index: 3, kind: input, shape index: {}]
  %s4 = inlined_call_operand.<no memory space> [shape: f32[1,1], index: 4, kind: input, shape index: {}]
  %s5 = inlined_call_operand.hbm [shape: f32[1,128], index: 5, kind: output, shape index: {}]
  %s6 = sld [smem:[#allocation0]]
  $region30: #{tpu_custom_call.1} parent=0
    _
  %s8 = ssub.s32 1, %s6
  %s9 = scalar_select 0, %s8, %s6
  %v10 = vstv %s4
  %11 = vst [vmem:[#allocation2] sm:$0x1] %v10
  $region1: #{tpu_custom_call.1} parent=0
    #allocation3 [shape = 'u8[512]{0}', space=vmem, size = 0x400, scoped, tag = 'output window, operand 0, single buffered']
    #allocation4 [shape = 's32[1]{0}', space=sflag, size = 0x4, scoped, tag = 'scoped memory for tpu_custom_call.1']
    %12 = vsyncpa [#allocation4], 0
    // Predicated region
    $region2: #{tpu_custom_call.1} parent=1 // pred_check
      _
    $region3: #{tpu_custom_call.1} parent=1 // pred_check_branch
      %14 = sbr.rel (0) target = $region5
    $region4: #{tpu_custom_call.1} parent=1 // pred_region
      _
    $region5: #{tpu_custom_call.1} parent=1 // pred_fallthru
      _
    // Predicated region
    $region6: #{tpu_custom_call.1} parent=1 // pred_check
      _
    $region7: #{tpu_custom_call.1} parent=1 // pred_check_branch
      %16 = sbr.rel (0) target = $region9
    $region8: #{tpu_custom_call.1} parent=1 // pred_region
      _
    $region9: #{tpu_custom_call.1} parent=1 // pred_fallthru
      _
    // Predicated region
    $region10: #{tpu_custom_call.1} parent=1 // pred_check
      _
    $region11: #{tpu_custom_call.1} parent=1 // pred_check_branch
      %18 = sbr.rel (0) target = $region13
    $region12: #{tpu_custom_call.1} parent=1 // pred_region
      _
    $region13: #{tpu_custom_call.1} parent=1 // pred_fallthru
      _
    // Predicated region
    $region14: #{tpu_custom_call.1} parent=1 // pred_check
      _
    $region15: #{tpu_custom_call.1} parent=1 // pred_check_branch
      %20 = sbr.rel (0) target = $region17
    $region16: #{tpu_custom_call.1} parent=1 // pred_region
      _
    $region17: #{tpu_custom_call.1} parent=1 // pred_fallthru
      _
    // Predicated region
    $region18: #{tpu_custom_call.1} parent=1 // pred_check
      _
    $region19: #{tpu_custom_call.1} parent=1 // pred_check_branch
      %22 = sbr.rel (0) target = $region21
    $region20: #{tpu_custom_call.1} parent=1 // pred_region
      _
    $region21: #{tpu_custom_call.1} parent=1 // pred_fallthru
      _
    %v24 = vld [vmem:[%s1] sm:$0xf]
    %v25 = vld [vmem:[%s1 + $0x4] sm:$0xf]
    %v26 = vld [vmem:[%s1 + $0x8] sm:$0xf]
    %v27 = vld [vmem:[%s1 + $0xc] sm:$0xf]
    %v28 = vld [vmem:[%s1 + $0x10] sm:$0xf]
    %v29 = vld [vmem:[%s1 + $0x14] sm:$0xf]
    %v30 = vld [vmem:[%s1 + $0x18] sm:$0xf]
    %v31 = vld [vmem:[%s1 + $0x1c] sm:$0xf]
    %v32 = vld [vmem:[%s0] sm:$0xf]
    %v33 = vld [vmem:[%s0 + $0x4] sm:$0xf]
    %v34 = vld [vmem:[%s2] sm:$0xff]
    %v35 = vld [vmem:[%s2 + $0x8] sm:$0xff]
    %v36 = vld [vmem:[%s2 + $0x10] sm:$0xff]
    %v37 = vld [vmem:[%s2 + $0x18] sm:$0xff]
    %v38 = vld [vmem:[%s2 + $0x20] sm:$0xff]
    %v39 = vld [vmem:[%s2 + $0x28] sm:$0xff]
    %v40 = vld [vmem:[%s2 + $0x30] sm:$0xff]
    %v41 = vld [vmem:[%s2 + $0x38] sm:$0xff]
    %43 = vset.pattern.permute.xlu0 0
    %44 = vperm.xlu0 %43, %v34
    %v45 = vpop.permute.xlu0 %44
    %48 = vset.pattern.permute.xlu0 0
    %49 = vperm.xlu0 %48, %v35
    %v50 = vpop.permute.xlu0 %49
    %53 = vset.pattern.permute.xlu0 0
    %54 = vperm.xlu0 %53, %v36
    %v55 = vpop.permute.xlu0 %54
    %58 = vset.pattern.permute.xlu0 0
    %59 = vperm.xlu0 %58, %v37
    %v60 = vpop.permute.xlu0 %59
    %63 = vset.pattern.permute.xlu0 0
    %64 = vperm.xlu0 %63, %v38
    %v65 = vpop.permute.xlu0 %64
    %68 = vset.pattern.permute.xlu0 0
    %69 = vperm.xlu0 %68, %v39
    %v70 = vpop.permute.xlu0 %69
    %73 = vset.pattern.permute.xlu0 0
    %74 = vperm.xlu0 %73, %v40
    %v75 = vpop.permute.xlu0 %74
    %78 = vset.pattern.permute.xlu0 0
    %79 = vperm.xlu0 %78, %v41
    %v80 = vpop.permute.xlu0 %79
    %v90 = vunpack.c.l.b16 %v24
    %v91 = vunpack.c.l.b16 %v25
    %v92 = vunpack.c.l.b16 %v26
    %v93 = vunpack.c.l.b16 %v27
    %v94 = vunpack.c.l.b16 %v28
    %v95 = vunpack.c.l.b16 %v29
    %v96 = vunpack.c.l.b16 %v30
    %v97 = vunpack.c.l.b16 %v31
    %v98 = vpack.c.b16 %v91, %v90
    %v99 = vpack.c.b16 %v93, %v92
    %v100 = vpack.c.b16 %v95, %v94
    %v101 = vpack.c.b16 %v97, %v96
    %v104 = vunpack.c.l.b16 %v32
    %v105 = vunpack.c.l.b16 %v33
    %v106 = vpack.c.b16 %v105, %v104
    %vm108 = vcmask 130048
    %v110 = vsel %vm108, %v98, 0
    %v113 = vsel %vm108, %v99, 0
    %v116 = vsel %vm108, %v100, 0
    %v119 = vsel %vm108, %v101, 0
    %121 = vmatprep.subr.bf16.mxu0 0
    %122 = vmatpush1.bf16.msra.mxu0 0
    %123 = vmatprep.subr.bf16.mxu0 0
    %124 = vmatpush1.bf16.msra.mxu0 0
    %125 = vmatprep.subr.bf16.mxu0 0
    %126 = vmatpush1.bf16.msra.mxu0 0
    %127 = vmatprep.subr.bf16.mxu0 0
    %128 = vmatpush1.bf16.msra.mxu0 0
    %129 = vmatprep.subr.bf16.mxu0 0
    %130 = vmatpush1.bf16.msra.mxu0 0
    %131 = vmatprep.subr.bf16.mxu0 0
    %132 = vmatpush1.bf16.msra.mxu0 0
    %133 = vmatprep.subr.bf16.mxu0 0
    %134 = vmatpush1.bf16.msra.mxu0 0
    %135 = vmatprep.subr.bf16.mxu0 0
    %136 = vmatpush1.bf16.msra.mxu0 %v106
    %137 = vmatprep.subr.bf16.mxu0 0
    %138 = vmatpush2.bf16.msra.mxu0 0
    %139 = vmatprep.subr.bf16.mxu0 0
    %140 = vmatpush2.bf16.msra.mxu0 0
    %141 = vmatprep.subr.bf16.mxu0 0
    %142 = vmatpush2.bf16.msra.mxu0 0
    %143 = vmatprep.subr.bf16.mxu0 0
    %144 = vmatpush2.bf16.msra.mxu0 0
    %145 = vmatprep.subr.bf16.mxu0 0
    %146 = vmatpush2.bf16.msra.mxu0 0
    %147 = vmatprep.subr.bf16.mxu0 0
    %148 = vmatpush2.bf16.msra.mxu0 0
    %149 = vmatprep.subr.bf16.mxu0 0
    %150 = vmatpush2.bf16.msra.mxu0 0
    %151 = vmatprep.subr.bf16.mxu0 0
    %152 = vmatpush2.bf16.msra.mxu0 0
    %153 = vmatprep.mubr.bf16.mxu0 0
    %154 = vmatmul.mubr.bf16.gmra.mxu0 %v110
    %v155 = vpop.f32.mrf.mxu0
    %v156 = vadd.f32 %v45, %v155
    %v157 = vpop.f32.mrf.mxu0
    %v158 = vpop.f32.mrf.mxu0
    %v159 = vadd.f32 %v50, %v158
    %v160 = vpop.f32.mrf.mxu0
    %161 = vmatprep.mubr.bf16.mxu0 0
    %162 = vmatmul.mubr.bf16.gmra.mxu0 %v113
    %v163 = vpop.f32.mrf.mxu0
    %v164 = vadd.f32 %v55, %v163
    %v165 = vpop.f32.mrf.mxu0
    %v166 = vpop.f32.mrf.mxu0
    %v167 = vadd.f32 %v60, %v166
    %v168 = vpop.f32.mrf.mxu0
    %169 = vmatprep.mubr.bf16.mxu0 0
    %170 = vmatmul.mubr.bf16.gmra.mxu0 %v116
    %v171 = vpop.f32.mrf.mxu0
    %v172 = vadd.f32 %v65, %v171
    %v173 = vpop.f32.mrf.mxu0
    %v174 = vpop.f32.mrf.mxu0
    %v175 = vadd.f32 %v70, %v174
    %v176 = vpop.f32.mrf.mxu0
    %177 = vmatprep.mubr.bf16.mxu0 0
    %178 = vmatmul.mubr.bf16.gmra.mxu0 %v119
    %v179 = vpop.f32.mrf.mxu0
    %v180 = vadd.f32 %v75, %v179
    %v181 = vpop.f32.mrf.mxu0
    %v182 = vpop.f32.mrf.mxu0
    %v183 = vadd.f32 %v80, %v182
    %v184 = vpop.f32.mrf.mxu0
    %185 = vdwg.mxu0
    %vm186 = vcmp.gt.f32.partialorder %v156, 0.0
    %vm187 = vcmp.gt.f32.partialorder %v159, 0.0
    %vm188 = vcmp.gt.f32.partialorder %v164, 0.0
    %vm189 = vcmp.gt.f32.partialorder %v167, 0.0
    %vm190 = vcmp.gt.f32.partialorder %v172, 0.0
    %vm191 = vcmp.gt.f32.partialorder %v175, 0.0
    %vm192 = vcmp.gt.f32.partialorder %v180, 0.0
    %vm193 = vcmp.gt.f32.partialorder %v183, 0.0
    %v194 = vmul.f32 %v156, 0.2
    %v195 = vmul.f32 %v159, 0.2
    %v196 = vmul.f32 %v164, 0.2
    %v197 = vmul.f32 %v167, 0.2
    %v198 = vmul.f32 %v172, 0.2
    %v199 = vmul.f32 %v175, 0.2
    %v200 = vmul.f32 %v180, 0.2
    %v201 = vmul.f32 %v183, 0.2
    %v202 = vsel %vm186, %v156, %v194
    %v203 = vsel %vm187, %v159, %v195
    %v204 = vsel %vm188, %v164, %v196
    %v205 = vsel %vm189, %v167, %v197
    %v206 = vsel %vm190, %v172, %v198
    %v207 = vsel %vm191, %v175, %v199
    %v208 = vsel %vm192, %v180, %v200
    %v209 = vsel %vm193, %v183, %v201
    %v210 = vld [vmem:[%s3] sm:$0x1]
    %v211 = vpack.c.bf16 %v203, %v202
    %v212 = vpack.c.bf16 %v205, %v204
    %v213 = vpack.c.bf16 %v207, %v206
    %v214 = vpack.c.bf16 %v209, %v208
    %v215 = vld [vmem:[#allocation2] sm:$0x1]
    %217 = vset.pattern.permute.xlu0 0
    %218 = vperm.xlu0 %217, %v215
    %v219 = vpop.permute.xlu0 %218
    %v221 = vlaneseq
    %v222 = vshrl.u32 %v221, 7
    %v223 = vsub.s32 0, %v222
    %v224 = vrot.slane %v219, %v223
    %vm225 = vcmask 523264
    %v227 = vsel %vm225, %v210, 0
    %229 = vmatprep.subr.bf16.mxu0 0
    %230 = vmatpush1.bf16.msra.mxu0 0
    %231 = vmatprep.subr.bf16.mxu0 0
    %232 = vmatpush1.bf16.msra.mxu0 0
    %233 = vmatprep.subr.bf16.mxu0 0
    %234 = vmatpush1.bf16.msra.mxu0 0
    %235 = vmatprep.subr.bf16.mxu0 0
    %236 = vmatpush1.bf16.msra.mxu0 0
    %237 = vmatprep.subr.bf16.mxu0 0
    %238 = vmatpush1.bf16.msra.mxu0 %v214
    %239 = vmatprep.subr.bf16.mxu0 0
    %240 = vmatpush1.bf16.msra.mxu0 %v213
    %241 = vmatprep.subr.bf16.mxu0 0
    %242 = vmatpush1.bf16.msra.mxu0 %v212
    %243 = vmatprep.subr.bf16.mxu0 0
    %244 = vmatpush1.bf16.msra.mxu0 %v211
    %245 = vmatprep.subr.bf16.mxu0 0
    %246 = vmatpush2.bf16.msra.mxu0 0
    %247 = vmatprep.subr.bf16.mxu0 0
    %248 = vmatpush2.bf16.msra.mxu0 0
    %249 = vmatprep.subr.bf16.mxu0 0
    %250 = vmatpush2.bf16.msra.mxu0 0
    %251 = vmatprep.subr.bf16.mxu0 0
    %252 = vmatpush2.bf16.msra.mxu0 0
    %253 = vmatprep.subr.bf16.mxu0 0
    %254 = vmatpush2.bf16.msra.mxu0 0
    %255 = vmatprep.subr.bf16.mxu0 0
    %256 = vmatpush2.bf16.msra.mxu0 0
    %257 = vmatprep.subr.bf16.mxu0 0
    %258 = vmatpush2.bf16.msra.mxu0 0
    %259 = vmatprep.subr.bf16.mxu0 0
    %260 = vmatpush2.bf16.msra.mxu0 0
    %261 = vmatprep.mubr.bf16.mxu0 0
    %262 = vmatmul.mubr.bf16.gmra.mxu0 %v227
    %v263 = vpop.f32.mrf.mxu0
    %v264 = vadd.f32 %v224, %v263
    %v265 = vpop.f32.mrf.mxu0
    %v266 = vpop.f32.mrf.mxu0
    %v267 = vpop.f32.mrf.mxu0
    %268 = vdwg.mxu0
    %269 = vst [vmem:[#allocation3] sm:$0x1] %v264
    // Predicated region
    $region22: #{tpu_custom_call.1} parent=1 // pred_check
      _
    $region23: #{tpu_custom_call.1} parent=1 // pred_check_branch
      %271 = sbr.rel (0) target = $region25
    $region24: #{tpu_custom_call.1} parent=1 // pred_region
      %s273 = ssub.s32 16, 16
      %274 = vsyncadd [#allocation4], %s273
      %s276 = sshll.u32 [#allocation3], 4
      %s277 = int_to_ptr.vmem [resolvable:$true] %s276
      %279 = dma.vmem_to_hbm [thread:$0]  %s277, 16, %s5, [#allocation4]
    $region25: #{tpu_custom_call.1} parent=1 // pred_fallthru
      _
    // Predicated region
    $region26: #{tpu_custom_call.1} parent=1 // pred_check
      _
    $region27: #{tpu_custom_call.1} parent=1 // pred_check_branch
      %281 = sbr.rel (0) target = $region29
    $region28: #{tpu_custom_call.1} parent=1 // pred_region
      %282 = dma.done [#allocation4], 16
    $region29: #{tpu_custom_call.1} parent=1 // pred_fallthru
      _
    %283 = vsyncpa [#allocation4], 1

</llo_original>
